<compile_context>
chip_gen: v7x
topology: tpu7x:2x2x1
jax: 0.10.0
libtpu: 0.0.40
codegen_flags: <defaults>
</compile_context>

<pallas_src>
import functools

import jax
import jax.numpy as jnp
from jax import lax
from jax.experimental import pallas as pl
from jax.experimental.pallas import tpu as pltpu

LN_EPS = 1e-6
_LANE = 128
_VMEM_TILE_BUDGET = 24 * 1024 * 1024   # conservative estimate target (fits v7x)
_VMEM_LIMIT_BYTES = 48 * 1024 * 1024   # > 32 MiB scoped default, < v7x physical


def _round_up(n, m):
    return (n + m - 1) // m * m


def _ffn_kernel(x_ref, w1_ref, b1_ref, w2_ref, b2_ref, g_ref, beta_ref, o_ref,
                *, d_valid):
    # Row tile (tm, d_pad).  Residual is the *pre*-LayerNorm input.
    x = x_ref[...].astype(jnp.float32)
    d_pad = x.shape[-1]
    inv_d = 1.0 / d_valid

    # LayerNorm over the valid part of the last dim, eps = 1e-6 (f32 math).
    # Padded feature columns are zero, so a plain sum gives the correct mean.
    mean = jnp.sum(x, axis=-1, keepdims=True) * inv_d
    centered = x - mean
    if d_valid != d_pad:
        col = lax.broadcasted_iota(jnp.int32, x.shape, dimension=1)
        centered_valid = jnp.where(col < d_valid, centered, 0.0)
    else:
        centered_valid = centered
    var = jnp.sum(centered_valid * centered_valid, axis=-1, keepdims=True) * inv_d
    inv_std = lax.rsqrt(var + LN_EPS)
    # gamma/beta are zero-padded, so padded xn columns come out exactly 0.
    xn = centered * inv_std * g_ref[...] + beta_ref[...]

    # FFN: relu(xn @ W1 + b1) @ W2 + b2 — bf16-fed MXU, f32 accumulation.
    h = jnp.dot(xn.astype(w1_ref.dtype), w1_ref[...],
                preferred_element_type=jnp.float32) + b1_ref[...]
    h = jnp.maximum(h, 0.0)
    y = jnp.dot(h.astype(w2_ref.dtype), w2_ref[...],
                preferred_element_type=jnp.float32) + b2_ref[...]

    # TODO(synk): dropout is identity here (inference / p=0); training-mode
    # dropout would use pltpu.prng_seed + pltpu.stateful_bernoulli.

    # Residual add (pre-LN input); padded rows/cols stay exactly zero.
    o_ref[...] = (y + x).astype(o_ref.dtype)


def position_wise_feed_forward(x, w1, b1, w2, b2, gamma, beta, *,
                               tm=512, mxu_dtype=jnp.bfloat16):
    """x: [batch, seq, d_in]; w1: [d_in, d_hid]; w2: [d_hid, d_in]."""
    batch, seq, d_in = x.shape
    d_hid = w1.shape[1]
    rows = batch * seq

    # Lane-dense feature layout: pad d_in / d_hid up to multiples of 128.
    d_pad = _round_up(d_in, _LANE)
    h_pad = _round_up(d_hid, _LANE)

    # Row tile: respect sublane packing (16 rows/vreg for bf16, 8 for f32),
    # don't exceed the row count, and stay inside the VMEM budget.
    row_align = 16 if x.dtype == jnp.bfloat16 else 8
    tm = max(row_align, _round_up(min(tm, rows), row_align))

    w_itemsize = jnp.dtype(mxu_dtype).itemsize
    x_itemsize = jnp.dtype(x.dtype).itemsize

    def vmem_estimate(tm_):
        xio = 2 * tm_ * d_pad * x_itemsize          # input tile, double-buffered
        oio = 2 * tm_ * d_pad * x_itemsize          # output tile, double-buffered
        wts = 2 * d_pad * h_pad * w_itemsize        # W1 + W2, single-buffered
        vecs = (h_pad + 3 * d_pad) * 4              # b1, b2, gamma, beta
        tmp = tm_ * (4 * d_pad + 2 * h_pad) * 4     # f32 temporaries (generous)
        return xio + oio + wts + vecs + tmp

    while tm > row_align and vmem_estimate(tm) > _VMEM_TILE_BUDGET:
        tm = max(row_align, (tm // 2) // row_align * row_align)

    rows_pad = _round_up(rows, tm)
    grid = (rows_pad // tm,)

    # Zero-pad everything; padded rows/cols are numerically inert and sliced off.
    x2d = jnp.pad(x.reshape(rows, d_in),
                  ((0, rows_pad - rows), (0, d_pad - d_in)))
    w1p = jnp.pad(w1.astype(mxu_dtype), ((0, d_pad - d_in), (0, h_pad - d_hid)))
    w2p = jnp.pad(w2.astype(mxu_dtype), ((0, h_pad - d_hid), (0, d_pad - d_in)))
    b1p = jnp.pad(b1.astype(jnp.float32), (0, h_pad - d_hid)).reshape(1, h_pad)
    b2p = jnp.pad(b2.astype(jnp.float32), (0, d_pad - d_in)).reshape(1, d_pad)
    g2d = jnp.pad(gamma.astype(jnp.float32), (0, d_pad - d_in)).reshape(1, d_pad)
    be2d = jnp.pad(beta.astype(jnp.float32), (0, d_pad - d_in)).reshape(1, d_pad)

    single = pl.Buffered(1)   # constant blocks: no double-buffer VMEM waste

    out = pl.pallas_call(
        functools.partial(_ffn_kernel, d_valid=d_in),
        out_shape=jax.ShapeDtypeStruct((rows_pad, d_pad), x.dtype),
        grid_spec=pltpu.PrefetchScalarGridSpec(
            num_scalar_prefetch=0,
            grid=grid,
            in_specs=[
                pl.BlockSpec((tm, d_pad), lambda i: (i, 0)),           # x rows
                pl.BlockSpec((d_pad, h_pad), lambda i: (0, 0),
                             pipeline_mode=single),                    # W1
                pl.BlockSpec((1, h_pad), lambda i: (0, 0),
                             pipeline_mode=single),                    # b1
                pl.BlockSpec((h_pad, d_pad), lambda i: (0, 0),
                             pipeline_mode=single),                    # W2
                pl.BlockSpec((1, d_pad), lambda i: (0, 0),
                             pipeline_mode=single),                    # b2
                pl.BlockSpec((1, d_pad), lambda i: (0, 0),
                             pipeline_mode=single),                    # gamma
                pl.BlockSpec((1, d_pad), lambda i: (0, 0),
                             pipeline_mode=single),                    # beta
            ],
            out_specs=pl.BlockSpec((tm, d_pad), lambda i: (i, 0)),
        ),
        compiler_params=pltpu.CompilerParams(
            dimension_semantics=("parallel",),
            vmem_limit_bytes=_VMEM_LIMIT_BYTES,
        ),
    )(x2d, w1p, b1p, w2p, b2p, g2d, be2d)

    return out[:rows, :d_in].reshape(batch, seq, d_in)


def _reference(x, w1, b1, w2, b2, gamma, beta):
    # Full-f32 reference matching the PyTorch module semantics.
    xf = x.astype(jnp.float32)
    mean = jnp.mean(xf, axis=-1, keepdims=True)
    var = jnp.mean((xf - mean) ** 2, axis=-1, keepdims=True)
    xn = (xf - mean) * lax.rsqrt(var + LN_EPS) * gamma + beta
    h = jnp.maximum(xn @ w1 + b1, 0.0)
    y = h @ w2 + b2
    return (y + xf).astype(x.dtype)


def _reference_mxu(x, w1, b1, w2, b2, gamma, beta, mxu_dtype):
    # Same math as the kernel: bf16-fed matmuls with f32 accumulation.
    xf = x.astype(jnp.float32)
    mean = jnp.mean(xf, axis=-1, keepdims=True)
    var = jnp.mean((xf - mean) ** 2, axis=-1, keepdims=True)
    xn = (xf - mean) * lax.rsqrt(var + LN_EPS) * gamma + beta
    h = jnp.maximum(
        jnp.dot(xn.astype(mxu_dtype), w1.astype(mxu_dtype),
                preferred_element_type=jnp.float32) + b1, 0.0)
    y = jnp.dot(h.astype(mxu_dtype), w2.astype(mxu_dtype),
                preferred_element_type=jnp.float32) + b2
    return (y + xf).astype(x.dtype)


if __name__ == "__main__":
    batch, seq = 2, 8
    d_in, d_hid = 32, 64

    key = jax.random.PRNGKey(0)
    kx, k1, kb1, k2, kb2 = jax.random.split(key, 5)

    x = jax.random.normal(kx, (batch, seq, d_in), dtype=jnp.float32)

    # Deterministic, Linear-like init (uniform in +/- 1/sqrt(fan_in)).
    bound1 = 1.0 / d_in ** 0.5
    bound2 = 1.0 / d_hid ** 0.5
    w1 = jax.random.uniform(k1, (d_in, d_hid), jnp.float32, -bound1, bound1)
    b1 = jax.random.uniform(kb1, (d_hid,), jnp.float32, -bound1, bound1)
    w2 = jax.random.uniform(k2, (d_hid, d_in), jnp.float32, -bound2, bound2)
    b2 = jax.random.uniform(kb2, (d_in,), jnp.float32, -bound2, bound2)
    gamma = jnp.ones((d_in,), jnp.float32)
    beta = jnp.zeros((d_in,), jnp.float32)

    out = position_wise_feed_forward(x, w1, b1, w2, b2, gamma, beta)
    out = jax.block_until_ready(out)
    assert out.shape == x.shape and out.dtype == x.dtype

    # Tight check vs a reference using the same bf16-fed MXU math.
    ref_mxu = _reference_mxu(x, w1, b1, w2, b2, gamma, beta, jnp.bfloat16)
    err_mxu = float(jnp.max(jnp.abs(out - ref_mxu)))
    assert err_mxu < 1e-2, f"mxu-matched max err {err_mxu}"

    # Loose check vs the full-f32 module semantics (bf16 MXU => relaxed tol).
    ref = _reference(x, w1, b1, w2, b2, gamma, beta)
    err = float(jnp.max(jnp.abs(out - ref)))
    assert err < 5e-2, f"f32-reference max err {err}"

    print("KERNEL_OK")
</pallas_src>

<mosaic_0001>
module attributes {stable_mosaic.version = 11 : i64} {
  func.func @_ffn_kernel(%arg0: i32, %arg1: memref<16x128xf32, #tpu.memory_space<vmem>>, %arg2: memref<128x128xbf16, #tpu.memory_space<vmem>>, %arg3: memref<1x128xf32, #tpu.memory_space<vmem>>, %arg4: memref<128x128xbf16, #tpu.memory_space<vmem>>, %arg5: memref<1x128xf32, #tpu.memory_space<vmem>>, %arg6: memref<1x128xf32, #tpu.memory_space<vmem>>, %arg7: memref<1x128xf32, #tpu.memory_space<vmem>>, %arg8: memref<16x128xf32, #tpu.memory_space<vmem>>) attributes {dimension_semantics = [#tpu.dimension_semantics<parallel>], iteration_bounds = array<i64: 1>, scalar_prefetch = 0 : i64, scratch_operands = 0 : i64, tpu.core_type = #tpu.core_type<tc>, window_params = [{transform_indices = @transform_0, window_bounds = array<i64: 16, 128>}, {pipeline_mode = #tpu.pipeline_mode<synchronous>, transform_indices = @transform_1, window_bounds = array<i64: 128, 128>}, {pipeline_mode = #tpu.pipeline_mode<synchronous>, transform_indices = @transform_2, window_bounds = array<i64: 1, 128>}, {pipeline_mode = #tpu.pipeline_mode<synchronous>, transform_indices = @transform_3, window_bounds = array<i64: 128, 128>}, {pipeline_mode = #tpu.pipeline_mode<synchronous>, transform_indices = @transform_4, window_bounds = array<i64: 1, 128>}, {pipeline_mode = #tpu.pipeline_mode<synchronous>, transform_indices = @transform_5, window_bounds = array<i64: 1, 128>}, {pipeline_mode = #tpu.pipeline_mode<synchronous>, transform_indices = @transform_6, window_bounds = array<i64: 1, 128>}, {transform_indices = @transform_7, window_bounds = array<i64: 16, 128>}]} {
    %c0 = arith.constant 0 : index
    %c0_0 = arith.constant 0 : index
    %0 = vector.load %arg1[%c0, %c0_0] : memref<16x128xf32, #tpu.memory_space<vmem>>, vector<16x128xf32>
    %cst = arith.constant dense<0.000000e+00> : vector<16xf32>
    %1 = vector.multi_reduction <add>, %0, %cst [1] : vector<16x128xf32> to vector<16xf32>
    %2 = vector.shape_cast %1 : vector<16xf32> to vector<16x1xf32>
    %cst_1 = arith.constant 3.125000e-02 : f32
    %3 = vector.broadcast %cst_1 : f32 to vector<16x1xf32>
    %4 = arith.mulf %2, %3 : vector<16x1xf32>
    %5 = vector.broadcast %4 : vector<16x1xf32> to vector<16x128xf32>
    %6 = arith.subf %0, %5 : vector<16x128xf32>
    %7 = tpu.iota {dimensions = array<i32: 1>} : vector<16x128xi32>
    %c32_i32 = arith.constant 32 : i32
    %8 = vector.broadcast %c32_i32 : i32 to vector<16x128xi32>
    %9 = arith.cmpi slt, %7, %8 : vector<16x128xi32>
    %cst_2 = arith.constant 0.000000e+00 : f32
    %10 = vector.broadcast %cst_2 : f32 to vector<16x128xf32>
    %11 = arith.select %9, %6, %10 : vector<16x128xi1>, vector<16x128xf32>
    %12 = arith.mulf %11, %11 : vector<16x128xf32>
    %cst_3 = arith.constant dense<0.000000e+00> : vector<16xf32>
    %13 = vector.multi_reduction <add>, %12, %cst_3 [1] : vector<16x128xf32> to vector<16xf32>
    %14 = vector.shape_cast %13 : vector<16xf32> to vector<16x1xf32>
    %cst_4 = arith.constant 3.125000e-02 : f32
    %15 = vector.broadcast %cst_4 : f32 to vector<16x1xf32>
    %16 = arith.mulf %14, %15 : vector<16x1xf32>
    %cst_5 = arith.constant 9.99999997E-7 : f32
    %17 = vector.broadcast %cst_5 : f32 to vector<16x1xf32>
    %18 = arith.addf %16, %17 : vector<16x1xf32>
    %19 = math.rsqrt %18 : vector<16x1xf32>
    %20 = vector.broadcast %19 : vector<16x1xf32> to vector<16x128xf32>
    %21 = arith.mulf %6, %20 : vector<16x128xf32>
    %c0_6 = arith.constant 0 : index
    %c0_7 = arith.constant 0 : index
    %22 = vector.load %arg6[%c0_6, %c0_7] : memref<1x128xf32, #tpu.memory_space<vmem>>, vector<1x128xf32>
    %23 = vector.broadcast %22 : vector<1x128xf32> to vector<16x128xf32>
    %24 = arith.mulf %21, %23 : vector<16x128xf32>
    %c0_8 = arith.constant 0 : index
    %c0_9 = arith.constant 0 : index
    %25 = vector.load %arg7[%c0_8, %c0_9] : memref<1x128xf32, #tpu.memory_space<vmem>>, vector<1x128xf32>
    %26 = vector.broadcast %25 : vector<1x128xf32> to vector<16x128xf32>
    %27 = arith.addf %24, %26 : vector<16x128xf32>
    %28 = arith.truncf %27 : vector<16x128xf32> to vector<16x128xbf16>
    %c0_10 = arith.constant 0 : index
    %c0_11 = arith.constant 0 : index
    %29 = vector.load %arg2[%c0_10, %c0_11] : memref<128x128xbf16, #tpu.memory_space<vmem>>, vector<128x128xbf16>
    %cst_12 = arith.constant dense<0.000000e+00> : vector<16x128xf32>
    %30 = tpu.matmul %28, %29, %cst_12 {dimension_numbers = #tpu.dot_dimension_numbers<[1], [0], [0], [1], [0, 0, 1, 1], [], []>} : vector<16x128xbf16>, vector<128x128xbf16>, vector<16x128xf32> -> vector<16x128xf32>
    %c0_13 = arith.constant 0 : index
    %c0_14 = arith.constant 0 : index
    %31 = vector.load %arg3[%c0_13, %c0_14] : memref<1x128xf32, #tpu.memory_space<vmem>>, vector<1x128xf32>
    %32 = vector.broadcast %31 : vector<1x128xf32> to vector<16x128xf32>
    %33 = arith.addf %30, %32 : vector<16x128xf32>
    %cst_15 = arith.constant 0.000000e+00 : f32
    %34 = vector.broadcast %cst_15 : f32 to vector<16x128xf32>
    %35 = arith.maximumf %33, %34 : vector<16x128xf32>
    %36 = arith.truncf %35 : vector<16x128xf32> to vector<16x128xbf16>
    %c0_16 = arith.constant 0 : index
    %c0_17 = arith.constant 0 : index
    %37 = vector.load %arg4[%c0_16, %c0_17] : memref<128x128xbf16, #tpu.memory_space<vmem>>, vector<128x128xbf16>
    %cst_18 = arith.constant dense<0.000000e+00> : vector<16x128xf32>
    %38 = tpu.matmul %36, %37, %cst_18 {dimension_numbers = #tpu.dot_dimension_numbers<[1], [0], [0], [1], [0, 0, 1, 1], [], []>} : vector<16x128xbf16>, vector<128x128xbf16>, vector<16x128xf32> -> vector<16x128xf32>
    %c0_19 = arith.constant 0 : index
    %c0_20 = arith.constant 0 : index
    %39 = vector.load %arg5[%c0_19, %c0_20] : memref<1x128xf32, #tpu.memory_space<vmem>>, vector<1x128xf32>
    %40 = vector.broadcast %39 : vector<1x128xf32> to vector<16x128xf32>
    %41 = arith.addf %38, %40 : vector<16x128xf32>
    %42 = arith.addf %41, %0 : vector<16x128xf32>
    %c0_21 = arith.constant 0 : index
    %c0_22 = arith.constant 0 : index
    %43 = vector.load %arg8[%c0_21, %c0_22] : memref<16x128xf32, #tpu.memory_space<vmem>>, vector<16x128xf32>
    tpu.vector_store %arg8[%c0_21, %c0_22], %42 {strides = array<i32>} : memref<16x128xf32, #tpu.memory_space<vmem>>, vector<16x128xf32>,
    return
  }
  func.func @transform_0(%arg0: i32) -> (i32, i32) {
    %c0_i32 = arith.constant 0 : i32
    %c0_i32_0 = arith.constant 0 : i32
    return %arg0, %c0_i32 : i32, i32
  }
  func.func @transform_1(%arg0: i32) -> (i32, i32) {
    %c0_i32 = arith.constant 0 : i32
    %c0_i32_0 = arith.constant 0 : i32
    %c0_i32_1 = arith.constant 0 : i32
    return %c0_i32, %c0_i32_0 : i32, i32
  }
  func.func @transform_2(%arg0: i32) -> (i32, i32) {
    %c0_i32 = arith.constant 0 : i32
    %c0_i32_0 = arith.constant 0 : i32
    %c0_i32_1 = arith.constant 0 : i32
    return %c0_i32, %c0_i32_0 : i32, i32
  }
  func.func @transform_3(%arg0: i32) -> (i32, i32) {
    %c0_i32 = arith.constant 0 : i32
    %c0_i32_0 = arith.constant 0 : i32
    %c0_i32_1 = arith.constant 0 : i32
    return %c0_i32, %c0_i32_0 : i32, i32
  }
  func.func @transform_4(%arg0: i32) -> (i32, i32) {
    %c0_i32 = arith.constant 0 : i32
    %c0_i32_0 = arith.constant 0 : i32
    %c0_i32_1 = arith.constant 0 : i32
    return %c0_i32, %c0_i32_0 : i32, i32
  }
  func.func @transform_5(%arg0: i32) -> (i32, i32) {
    %c0_i32 = arith.constant 0 : i32
    %c0_i32_0 = arith.constant 0 : i32
    %c0_i32_1 = arith.constant 0 : i32
    return %c0_i32, %c0_i32_0 : i32, i32
  }
  func.func @transform_6(%arg0: i32) -> (i32, i32) {
    %c0_i32 = arith.constant 0 : i32
    %c0_i32_0 = arith.constant 0 : i32
    %c0_i32_1 = arith.constant 0 : i32
    return %c0_i32, %c0_i32_0 : i32, i32
  }
  func.func @transform_7(%arg0: i32) -> (i32, i32) {
    %c0_i32 = arith.constant 0 : i32
    %c0_i32_0 = arith.constant 0 : i32
    return %arg0, %c0_i32 : i32, i32
  }
}

</mosaic_0001>

<llo_original>
// kernel: tpu_custom_call.1
$region0: #{tpu_custom_call.1}
  #allocation0 [shape = 'u32[]', space=smem, size = 0x4, offset = 0x4, fixed_abs, tag = 'smem constant byte address 0x4 - core index']
  #allocation1 [shape = 'u32[144,128]{1,0:T(1,128)}', space=vmem, size = 0x12000, scoped, tag = 'internal scratch']
  %s0 = inlined_call_operand.hbm [shape: f32[16,128], index: 0, kind: input, shape index: {}]
  %s1 = inlined_call_operand.hbm [shape: bf16[128,128], index: 1, kind: input, shape index: {}]
  %s2 = inlined_call_operand.vmem [shape: f32[1,128], index: 2, kind: input, shape index: {}]
  %s3 = inlined_call_operand.hbm [shape: bf16[128,128], index: 3, kind: input, shape index: {}]
  %s4 = inlined_call_operand.vmem [shape: f32[1,128], index: 4, kind: input, shape index: {}]
  %s5 = inlined_call_operand.vmem [shape: f32[1,128], index: 5, kind: input, shape index: {}]
  %s6 = inlined_call_operand.vmem [shape: f32[1,128], index: 6, kind: input, shape index: {}]
  %s7 = inlined_call_operand.hbm [shape: f32[16,128], index: 7, kind: output, shape index: {}]
  %s8 = sld [smem:[#allocation0]]
  $region50: #{tpu_custom_call.1} parent=0
    _
  %s10 = ssub.s32 1, %s8
  %s11 = scalar_select 0, %s10, %s8
  $region1: #{tpu_custom_call.1} parent=0
    #allocation2 [shape = 'u8[8192]{0}', space=vmem, size = 0x2000, scoped, tag = 'input window, operand 0, single buffered']
    #allocation3 [shape = 's32[1]{0}', space=sflag, size = 0x4, scoped, tag = 'scoped memory for tpu_custom_call.1']
    #allocation4 [shape = 's32[1]{0}', space=sflag, size = 0x4, scoped, tag = 'scoped memory for tpu_custom_call.1']
    #allocation5 [shape = 'u8[32768]{0}', space=vmem, size = 0x8000, scoped, tag = 'input window, operand 1, single buffered']
    #allocation6 [shape = 's32[1]{0}', space=sflag, size = 0x4, scoped, tag = 'scoped memory for tpu_custom_call.1']
    #allocation7 [shape = 'u8[32768]{0}', space=vmem, size = 0x8000, scoped, tag = 'input window, operand 3, single buffered']
    #allocation8 [shape = 'u8[8192]{0}', space=vmem, size = 0x2000, scoped, tag = 'output window, operand 0, single buffered']
    %12 = vsyncpa [#allocation3], 0
    %13 = vsyncpa [#allocation6], 0
    %14 = vsyncpa [#allocation4], 0
    // Predicated region
    $region2: #{tpu_custom_call.1} parent=1 // pred_check
      _
    $region3: #{tpu_custom_call.1} parent=1 // pred_check_branch
      %16 = sbr.rel (0) target = $region5
    $region4: #{tpu_custom_call.1} parent=1 // pred_region
      %s18 = ssub.s32 256, 256
      %19 = vsyncadd [#allocation3], %s18
      %s20 = sshll.u32 [#allocation2], 4
      %s21 = int_to_ptr.vmem [resolvable:$true] %s20
      %26 = dma.hbm_to_vmem [thread:$0]  %s0, 256, %s21, [#allocation3], 128, 128, 8
    $region5: #{tpu_custom_call.1} parent=1 // pred_fallthru
      _
    // Predicated region
    $region6: #{tpu_custom_call.1} parent=1 // pred_check
      _
    $region7: #{tpu_custom_call.1} parent=1 // pred_check_branch
      %28 = sbr.rel (0) target = $region9
    $region8: #{tpu_custom_call.1} parent=1 // pred_region
      %s30 = ssub.s32 1024, 1024
      %31 = vsyncadd [#allocation6], %s30
      %s32 = sshll.u32 [#allocation5], 4
      %s33 = int_to_ptr.vmem [resolvable:$true] %s32
      %38 = dma.hbm_to_vmem [thread:$0]  %s1, 1024, %s33, [#allocation6], 64, 64, 4
    $region9: #{tpu_custom_call.1} parent=1 // pred_fallthru
      _
    // Predicated region
    $region10: #{tpu_custom_call.1} parent=1 // pred_check
      _
    $region11: #{tpu_custom_call.1} parent=1 // pred_check_branch
      %40 = sbr.rel (0) target = $region13
    $region12: #{tpu_custom_call.1} parent=1 // pred_region
      _
    $region13: #{tpu_custom_call.1} parent=1 // pred_fallthru
      _
    // Predicated region
    $region14: #{tpu_custom_call.1} parent=1 // pred_check
      _
    $region15: #{tpu_custom_call.1} parent=1 // pred_check_branch
      %42 = sbr.rel (0) target = $region17
    $region16: #{tpu_custom_call.1} parent=1 // pred_region
      %s44 = ssub.s32 1024, 1024
      %45 = vsyncadd [#allocation6], %s44
      %s46 = sshll.u32 [#allocation7], 4
      %s47 = int_to_ptr.vmem [resolvable:$true] %s46
      %52 = dma.hbm_to_vmem [thread:$0]  %s3, 1024, %s47, [#allocation6], 64, 64, 4
    $region17: #{tpu_custom_call.1} parent=1 // pred_fallthru
      _
    // Predicated region
    $region18: #{tpu_custom_call.1} parent=1 // pred_check
      _
    $region19: #{tpu_custom_call.1} parent=1 // pred_check_branch
      %54 = sbr.rel (0) target = $region21
    $region20: #{tpu_custom_call.1} parent=1 // pred_region
      _
    $region21: #{tpu_custom_call.1} parent=1 // pred_fallthru
      _
    // Predicated region
    $region22: #{tpu_custom_call.1} parent=1 // pred_check
      _
    $region23: #{tpu_custom_call.1} parent=1 // pred_check_branch
      %56 = sbr.rel (0) target = $region25
    $region24: #{tpu_custom_call.1} parent=1 // pred_region
      _
    $region25: #{tpu_custom_call.1} parent=1 // pred_fallthru
      _
    // Predicated region
    $region26: #{tpu_custom_call.1} parent=1 // pred_check
      _
    $region27: #{tpu_custom_call.1} parent=1 // pred_check_branch
      %58 = sbr.rel (0) target = $region29
    $region28: #{tpu_custom_call.1} parent=1 // pred_region
      _
    $region29: #{tpu_custom_call.1} parent=1 // pred_fallthru
      _
    // Predicated region
    $region30: #{tpu_custom_call.1} parent=1 // pred_check
      _
    $region31: #{tpu_custom_call.1} parent=1 // pred_check_branch
      %60 = sbr.rel (0) target = $region33
    $region32: #{tpu_custom_call.1} parent=1 // pred_region
      %61 = dma.done [#allocation3], 256
    $region33: #{tpu_custom_call.1} parent=1 // pred_fallthru
      _
    // Predicated region
    $region34: #{tpu_custom_call.1} parent=1 // pred_check
      _
    $region35: #{tpu_custom_call.1} parent=1 // pred_check_branch
      %63 = sbr.rel (0) target = $region37
    $region36: #{tpu_custom_call.1} parent=1 // pred_region
      %64 = dma.done [#allocation6], 1024
    $region37: #{tpu_custom_call.1} parent=1 // pred_fallthru
      _
    // Predicated region
    $region38: #{tpu_custom_call.1} parent=1 // pred_check
      _
    $region39: #{tpu_custom_call.1} parent=1 // pred_check_branch
      %66 = sbr.rel (0) target = $region41
    $region40: #{tpu_custom_call.1} parent=1 // pred_region
      %67 = dma.done [#allocation6], 1024
    $region41: #{tpu_custom_call.1} parent=1 // pred_fallthru
      _
    %v69 = vld [vmem:[#allocation2] sm:$0xff]
    %v70 = vld [vmem:[#allocation2 + $0x8] sm:$0xff]
    %71 = vadd.xlane.f32.xlu0 %v69
    %v72 = vpop.xlane.xlu0 %71
    %73 = vadd.xlane.f32.xlu0 %v70
    %v74 = vpop.xlane.xlu0 %73
    %v75 = vmul.f32 %v72, 0.03125
    %v76 = vmul.f32 %v74, 0.03125
    %v77 = vsub.f32 %v69, %v75
    %v78 = vsub.f32 %v70, %v76
    %v79 = vlaneseq
    %v80 = vand.u32 %v79, 127
    %vm81 = vcmp.lt.s32.totalorder %v80, 32
    %v82 = vsel %vm81, %v77, 0.0
    %v83 = vsel %vm81, %v78, 0.0
    %v84 = vmul.f32 %v82, %v82
    %v85 = vmul.f32 %v83, %v83
    %86 = vadd.xlane.f32.xlu0 %v84
    %v87 = vpop.xlane.xlu0 %86
    %88 = vadd.xlane.f32.xlu0 %v85
    %v89 = vpop.xlane.xlu0 %88
    %v90 = vmul.f32 %v87, 0.03125
    %v91 = vmul.f32 %v89, 0.03125
    %v92 = vadd.f32 %v90, 1e-06
    %v93 = vadd.f32 %v91, 1e-06
    %v94 = vrsqrt.pop %v92
    %v95 = vrsqrt.pop %v93
    %v96 = vmul.f32 %v77, %v94
    %v97 = vmul.f32 %v78, %v95
    %v98 = vld [vmem:[%s5] sm:$0x1]
    %v100 = vlaneseq
    %v101 = vshrl.u32 %v100, 7
    %v102 = vsub.s32 0, %v101
    %v103 = vrot.slane %v98, %v102
    %v105 = vmul.f32 %v96, %v103
    %v106 = vmul.f32 %v97, %v103
    %v107 = vld [vmem:[%s6] sm:$0x1]
    %v109 = vlaneseq
    %v110 = vshrl.u32 %v109, 7
    %v111 = vsub.s32 0, %v110
    %v112 = vrot.slane %v107, %v111
    %v114 = vadd.f32 %v105, %v112
    %v115 = vadd.f32 %v106, %v112
    %v116 = vpack.c.bf16 %v115, %v114
    %v117 = vld [vmem:[#allocation5] sm:$0xf]
    %v118 = vld [vmem:[#allocation5 + $0x4] sm:$0xf]
    %v119 = vld [vmem:[#allocation5 + $0x8] sm:$0xf]
    %v120 = vld [vmem:[#allocation5 + $0xc] sm:$0xf]
    %v121 = vld [vmem:[#allocation5 + $0x10] sm:$0xf]
    %v122 = vld [vmem:[#allocation5 + $0x14] sm:$0xf]
    %v123 = vld [vmem:[#allocation5 + $0x18] sm:$0xf]
    %v124 = vld [vmem:[#allocation5 + $0x1c] sm:$0xf]
    %v125 = vld [vmem:[#allocation5 + $0x20] sm:$0xf]
    %v126 = vld [vmem:[#allocation5 + $0x24] sm:$0xf]
    %v127 = vld [vmem:[#allocation5 + $0x28] sm:$0xf]
    %v128 = vld [vmem:[#allocation5 + $0x2c] sm:$0xf]
    %v129 = vld [vmem:[#allocation5 + $0x30] sm:$0xf]
    %v130 = vld [vmem:[#allocation5 + $0x34] sm:$0xf]
    %v131 = vld [vmem:[#allocation5 + $0x38] sm:$0xf]
    %v132 = vld [vmem:[#allocation5 + $0x3c] sm:$0xf]
    %v133 = vld [vmem:[%s2] sm:$0x1]
    %v135 = vlaneseq
    %v136 = vshrl.u32 %v135, 7
    %v137 = vsub.s32 0, %v136
    %v138 = vrot.slane %v133, %v137
    %v156 = vunpack.c.l.b16 %v117
    %v157 = vunpack.c.l.b16 %v118
    %v158 = vunpack.c.l.b16 %v119
    %v159 = vunpack.c.l.b16 %v120
    %v160 = vunpack.c.l.b16 %v121
    %v161 = vunpack.c.l.b16 %v122
    %v162 = vunpack.c.l.b16 %v123
    %v163 = vunpack.c.l.b16 %v124
    %v164 = vunpack.c.l.b16 %v125
    %v165 = vunpack.c.l.b16 %v126
    %v166 = vunpack.c.l.b16 %v127
    %v167 = vunpack.c.l.b16 %v128
    %v168 = vunpack.c.l.b16 %v129
    %v169 = vunpack.c.l.b16 %v130
    %v170 = vunpack.c.l.b16 %v131
    %v171 = vunpack.c.l.b16 %v132
    %v172 = vpack.c.b16 %v157, %v156
    %v173 = vpack.c.b16 %v159, %v158
    %v174 = vpack.c.b16 %v161, %v160
    %v175 = vpack.c.b16 %v163, %v162
    %v176 = vpack.c.b16 %v165, %v164
    %v177 = vpack.c.b16 %v167, %v166
    %v178 = vpack.c.b16 %v169, %v168
    %v179 = vpack.c.b16 %v171, %v170
    %188 = vmatprep.subr.bf16.mxu0 0
    %189 = vmatpush1.bf16.msra.mxu0 %v172
    %190 = vmatprep.subr.bf16.mxu0 0
    %191 = vmatpush1.bf16.msra.mxu0 %v173
    %192 = vmatprep.subr.bf16.mxu0 0
    %193 = vmatpush1.bf16.msra.mxu0 %v174
    %194 = vmatprep.subr.bf16.mxu0 0
    %195 = vmatpush1.bf16.msra.mxu0 %v175
    %196 = vmatprep.subr.bf16.mxu0 0
    %197 = vmatpush1.bf16.msra.mxu0 %v176
    %198 = vmatprep.subr.bf16.mxu0 0
    %199 = vmatpush1.bf16.msra.mxu0 %v177
    %200 = vmatprep.subr.bf16.mxu0 0
    %201 = vmatpush1.bf16.msra.mxu0 %v178
    %202 = vmatprep.subr.bf16.mxu0 0
    %203 = vmatpush1.bf16.msra.mxu0 %v179
    %204 = vmatprep.subr.bf16.mxu0 0
    %205 = vmatpush1.bf16.msra.mxu0 0
    %206 = vmatprep.subr.bf16.mxu0 0
    %207 = vmatpush1.bf16.msra.mxu0 0
    %208 = vmatprep.subr.bf16.mxu0 0
    %209 = vmatpush1.bf16.msra.mxu0 0
    %210 = vmatprep.subr.bf16.mxu0 0
    %211 = vmatpush1.bf16.msra.mxu0 0
    %212 = vmatprep.subr.bf16.mxu0 0
    %213 = vmatpush1.bf16.msra.mxu0 0
    %214 = vmatprep.subr.bf16.mxu0 0
    %215 = vmatpush1.bf16.msra.mxu0 0
    %216 = vmatprep.subr.bf16.mxu0 0
    %217 = vmatpush1.bf16.msra.mxu0 0
    %218 = vmatprep.subr.bf16.mxu0 0
    %219 = vmatpush1.bf16.msra.mxu0 0
    %220 = vmatprep.mubr.bf16.mxu0 0
    %221 = vmatmul.mubr.bf16.gmra.mrb[0].mxu0 %v116
    %v222 = vpop.f32.mrb[0].mxu0
    %v223 = vadd.f32 %v138, %v222
    %v224 = vpop.f32.mrb[0].mxu0
    %v225 = vpop.f32.mrb[0].mxu0
    %v226 = vadd.f32 %v138, %v225
    %v227 = vpop.f32.mrb[0].mxu0
    %228 = vdwg.mxu0
    %v229 = vmax.f32 %v223, 0.0
    %v230 = vmax.f32 %v226, 0.0
    %v231 = vpack.c.bf16 %v230, %v229
    %v232 = vld [vmem:[#allocation7] sm:$0xf]
    %v233 = vld [vmem:[#allocation7 + $0x4] sm:$0xf]
    %v234 = vld [vmem:[#allocation7 + $0x8] sm:$0xf]
    %v235 = vld [vmem:[#allocation7 + $0xc] sm:$0xf]
    %v236 = vld [vmem:[#allocation7 + $0x10] sm:$0xf]
    %v237 = vld [vmem:[#allocation7 + $0x14] sm:$0xf]
    %v238 = vld [vmem:[#allocation7 + $0x18] sm:$0xf]
    %v239 = vld [vmem:[#allocation7 + $0x1c] sm:$0xf]
    %v240 = vld [vmem:[#allocation7 + $0x20] sm:$0xf]
    %v241 = vld [vmem:[#allocation7 + $0x24] sm:$0xf]
    %v242 = vld [vmem:[#allocation7 + $0x28] sm:$0xf]
    %v243 = vld [vmem:[#allocation7 + $0x2c] sm:$0xf]
    %v244 = vld [vmem:[#allocation7 + $0x30] sm:$0xf]
    %v245 = vld [vmem:[#allocation7 + $0x34] sm:$0xf]
    %v246 = vld [vmem:[#allocation7 + $0x38] sm:$0xf]
    %v247 = vld [vmem:[#allocation7 + $0x3c] sm:$0xf]
    %v248 = vld [vmem:[%s4] sm:$0x1]
    %v250 = vlaneseq
    %v251 = vshrl.u32 %v250, 7
    %v252 = vsub.s32 0, %v251
    %v253 = vrot.slane %v248, %v252
    %v271 = vunpack.c.l.b16 %v232
    %v272 = vunpack.c.l.b16 %v233
    %v273 = vunpack.c.l.b16 %v234
    %v274 = vunpack.c.l.b16 %v235
    %v275 = vunpack.c.l.b16 %v236
    %v276 = vunpack.c.l.b16 %v237
    %v277 = vunpack.c.l.b16 %v238
    %v278 = vunpack.c.l.b16 %v239
    %v279 = vunpack.c.l.b16 %v240
    %v280 = vunpack.c.l.b16 %v241
    %v281 = vunpack.c.l.b16 %v242
    %v282 = vunpack.c.l.b16 %v243
    %v283 = vunpack.c.l.b16 %v244
    %v284 = vunpack.c.l.b16 %v245
    %v285 = vunpack.c.l.b16 %v246
    %v286 = vunpack.c.l.b16 %v247
    %v287 = vpack.c.b16 %v272, %v271
    %v288 = vpack.c.b16 %v274, %v273
    %v289 = vpack.c.b16 %v276, %v275
    %v290 = vpack.c.b16 %v278, %v277
    %v291 = vpack.c.b16 %v280, %v279
    %v292 = vpack.c.b16 %v282, %v281
    %v293 = vpack.c.b16 %v284, %v283
    %v294 = vpack.c.b16 %v286, %v285
    %303 = vmatprep.subr.bf16.mxu0 0
    %304 = vmatpush1.bf16.msra.mxu0 %v287
    %305 = vmatprep.subr.bf16.mxu0 0
    %306 = vmatpush1.bf16.msra.mxu0 %v288
    %307 = vmatprep.subr.bf16.mxu0 0
    %308 = vmatpush1.bf16.msra.mxu0 %v289
    %309 = vmatprep.subr.bf16.mxu0 0
    %310 = vmatpush1.bf16.msra.mxu0 %v290
    %311 = vmatprep.subr.bf16.mxu0 0
    %312 = vmatpush1.bf16.msra.mxu0 %v291
    %313 = vmatprep.subr.bf16.mxu0 0
    %314 = vmatpush1.bf16.msra.mxu0 %v292
    %315 = vmatprep.subr.bf16.mxu0 0
    %316 = vmatpush1.bf16.msra.mxu0 %v293
    %317 = vmatprep.subr.bf16.mxu0 0
    %318 = vmatpush1.bf16.msra.mxu0 %v294
    %319 = vmatprep.subr.bf16.mxu0 0
    %320 = vmatpush1.bf16.msra.mxu0 0
    %321 = vmatprep.subr.bf16.mxu0 0
    %322 = vmatpush1.bf16.msra.mxu0 0
    %323 = vmatprep.subr.bf16.mxu0 0
    %324 = vmatpush1.bf16.msra.mxu0 0
    %325 = vmatprep.subr.bf16.mxu0 0
    %326 = vmatpush1.bf16.msra.mxu0 0
    %327 = vmatprep.subr.bf16.mxu0 0
    %328 = vmatpush1.bf16.msra.mxu0 0
    %329 = vmatprep.subr.bf16.mxu0 0
    %330 = vmatpush1.bf16.msra.mxu0 0
    %331 = vmatprep.subr.bf16.mxu0 0
    %332 = vmatpush1.bf16.msra.mxu0 0
    %333 = vmatprep.subr.bf16.mxu0 0
    %334 = vmatpush1.bf16.msra.mxu0 0
    %335 = vmatprep.mubr.bf16.mxu0 0
    %336 = vmatmul.mubr.bf16.gmra.mrb[0].mxu0 %v231
    %v337 = vpop.f32.mrb[0].mxu0
    %v338 = vadd.f32 %v253, %v337
    %v339 = vpop.f32.mrb[0].mxu0
    %v340 = vpop.f32.mrb[0].mxu0
    %v341 = vadd.f32 %v253, %v340
    %v342 = vpop.f32.mrb[0].mxu0
    %343 = vdwg.mxu0
    %v344 = vadd.f32 %v338, %v69
    %v345 = vadd.f32 %v341, %v70
    %346 = vst [vmem:[#allocation8] sm:$0xff] %v344
    %347 = vst [vmem:[#allocation8 + $0x8] sm:$0xff] %v345
    // Predicated region
    $region42: #{tpu_custom_call.1} parent=1 // pred_check
      _
    $region43: #{tpu_custom_call.1} parent=1 // pred_check_branch
      %349 = sbr.rel (0) target = $region45
    $region44: #{tpu_custom_call.1} parent=1 // pred_region
      %s351 = ssub.s32 256, 256
      %352 = vsyncadd [#allocation4], %s351
      %s353 = sshll.u32 [#allocation8], 4
      %s354 = int_to_ptr.vmem [resolvable:$true] %s353
      %359 = dma.vmem_to_hbm [thread:$0]  %s354, 256, %s7, [#allocation4], 128, 128, 8
    $region45: #{tpu_custom_call.1} parent=1 // pred_fallthru
      _
    // Predicated region
    $region46: #{tpu_custom_call.1} parent=1 // pred_check
      _
    $region47: #{tpu_custom_call.1} parent=1 // pred_check_branch
      %361 = sbr.rel (0) target = $region49
    $region48: #{tpu_custom_call.1} parent=1 // pred_region
      %362 = dma.done [#allocation4], 256
    $region49: #{tpu_custom_call.1} parent=1 // pred_fallthru
      _
    %363 = vsyncpa [#allocation3], 1
    %364 = vsyncpa [#allocation6], 1
    %365 = vsyncpa [#allocation4], 1

</llo_original>
